<compile_context>
chip_gen: v5e
topology: v5e:2x2
jax: 0.10.0
libtpu: 0.0.40
codegen_flags: <defaults>
</compile_context>

<pallas_src>
import functools

import jax
import jax.numpy as jnp
from jax import lax
from jax.experimental import pallas as pl
from jax.experimental.pallas import tpu as pltpu

LANES = 128
SUBLANES = 8


def _fold(sq, block_rows):
    # Fold a (block_rows, 128) f32 tile onto an (8, 128) vreg-shaped partial
    # using pure VPU adds (reshape stays on (8, 128) tile boundaries).
    return jnp.sum(sq.reshape(block_rows // SUBLANES, SUBLANES, LANES), axis=0)


def _rmse_partial_kernel(x_ref, y_ref, out_ref, *,
                         block_rows, tiles_per_core, rows_valid, needs_mask):
    c = pl.program_id(0)   # core axis ("parallel"; split across TCs on v7x)
    i = pl.program_id(1)   # streaming/reduction axis ("arbitrary")

    @pl.when(i == 0)
    def _():
        out_ref[...] = jnp.zeros_like(out_ref)

    d = x_ref[...].astype(jnp.float32) - y_ref[...].astype(jnp.float32)
    sq = d * d

    if needs_mask:
        g = c * tiles_per_core + i                       # global tile index
        fully_valid = (g + 1) * block_rows <= rows_valid

        @pl.when(fully_valid)
        def _():   # fast path: no per-element mask work
            out_ref[...] += _fold(sq, block_rows)[None, :, :]

        @pl.when(jnp.logical_not(fully_valid))
        def _():   # overhanging (or fully OOB round-up) tile: mask garbage rows
            row_ids = g * block_rows + lax.broadcasted_iota(
                jnp.int32, sq.shape, 0)
            masked = jnp.where(row_ids < rows_valid, sq, 0.0)
            out_ref[...] += _fold(masked, block_rows)[None, :, :]
    else:
        out_ref[...] += _fold(sq, block_rows)[None, :, :]


def _tpu_kind():
    try:
        return jax.devices()[0].device_kind.lower()
    except Exception:
        return ""


def rmse_loss(x, y, *, block_rows=None, num_cores=None):
    assert x.shape == y.shape, "x and y must have the same shape"
    n_elements = x.size
    assert n_elements > 0, "empty input"

    kind = _tpu_kind()
    if num_cores is None:
        num_cores = 2 if "v7" in kind else 1       # v7x: 2 TensorCores / chip
    num_cores = max(1, int(num_cores))
    # ~2 MiB / input / pipeline buffer (4 MiB on v6e/v7x) amortizes the
    # ~0.35 us per-step overhead to <10% of the DMA while staying under the
    # scoped-VMEM defaults (2 inputs x 2 buffers -> 8 / 16 MiB total).
    target_bytes = (4 << 20) if ("v7" in kind or "v6" in kind) else (2 << 20)

    xf = x.reshape(-1)
    yf = y.reshape(-1)

    # <128-element tail handled in plain JAX so we never jnp.pad (full-array
    # copy) the flattened inputs.  Zero tail when n is already 128-aligned.
    rem = n_elements % LANES
    if rem:
        xt = xf[n_elements - rem:].astype(jnp.float32)
        yt = yf[n_elements - rem:].astype(jnp.float32)
        tail_sum = jnp.sum((xt - yt) * (xt - yt))
        xf = xf[:n_elements - rem]
        yf = yf[:n_elements - rem]
    else:
        tail_sum = jnp.float32(0.0)

    rows = (n_elements - rem) // LANES
    if rows == 0:
        # Degenerate (<128 elements): everything lives in the tail.
        return jnp.sqrt(tail_sum / jnp.float32(n_elements))

    x2d = xf.reshape(rows, LANES)   # contiguous reshape (no copy when rem==0)
    y2d = yf.reshape(rows, LANES)

    # Block rows: byte-targeted per dtype, multiple of 16 (covers f32 (8,128)
    # and bf16 (16,128) packing), clamped so tiny inputs take one grid step.
    if block_rows is None:
        block_rows = target_bytes // (LANES * x.dtype.itemsize)
    block_rows = min(int(block_rows), pl.cdiv(rows, 16) * 16)
    block_rows = max(16, (block_rows // 16) * 16)

    num_tiles = pl.cdiv(rows, block_rows)
    tiles_per_core = pl.cdiv(num_tiles, num_cores)
    # Mask code is only compiled in if some tile overhangs the real rows
    # (ragged last tile and/or the per-core round-up).
    needs_mask = num_cores * tiles_per_core * block_rows != rows
    last_tile = num_tiles - 1

    def in_index_map(c, i):
        # Clamp fully-out-of-range tiles (per-core round-up) onto the last
        # real tile; their contribution is masked to zero in the kernel.
        return (jnp.minimum(c * tiles_per_core + i, last_tile), 0)

    kernel = functools.partial(
        _rmse_partial_kernel,
        block_rows=block_rows,
        tiles_per_core=tiles_per_core,
        rows_valid=rows,
        needs_mask=needs_mask,
    )

    out_nbytes = num_cores * SUBLANES * LANES * 4
    partials = pl.pallas_call(
        kernel,
        out_shape=jax.ShapeDtypeStruct((num_cores, SUBLANES, LANES),
                                       jnp.float32),
        grid_spec=pltpu.PrefetchScalarGridSpec(
            num_scalar_prefetch=0,
            grid=(num_cores, tiles_per_core),
            in_specs=[
                pl.BlockSpec((block_rows, LANES), in_index_map),
                pl.BlockSpec((block_rows, LANES), in_index_map),
            ],
            out_specs=pl.BlockSpec((1, SUBLANES, LANES),
                                   lambda c, i: (c, 0, 0)),
        ),
        compiler_params=pltpu.CompilerParams(
            dimension_semantics=("parallel", "arbitrary"),
        ),
        cost_estimate=pl.CostEstimate(
            flops=3 * rows * LANES,
            transcendentals=0,
            bytes_accessed=x2d.nbytes + y2d.nbytes + out_nbytes,
        ),
    )(x2d, y2d)

    # Final cross-lane reduce + sqrt(mean) in plain JAX.
    total = jnp.sum(partials) + tail_sum
    return jnp.sqrt(total / jnp.float32(n_elements))


if __name__ == "__main__":
    key = jax.random.PRNGKey(0)

    # Primary example: same shape as the PyTorch module's intended inputs.
    kx, ky = jax.random.split(key)
    x = jax.random.normal(kx, (2, 4, 16, 16), dtype=jnp.float32)
    y = jax.random.normal(ky, (2, 4, 16, 16), dtype=jnp.float32)
    loss = rmse_loss(x, y)
    jax.block_until_ready(loss)
    ref = jnp.sqrt(jnp.mean((x - y) ** 2))
    assert jnp.allclose(loss, ref, rtol=1e-5, atol=1e-6), (loss, ref)

    # Multi-tile path (several grid steps with a small explicit block).
    k1, k2 = jax.random.split(ky)
    xa = jax.random.normal(k1, (2, 4, 128, 256), dtype=jnp.float32)
    ya = jax.random.normal(k2, (2, 4, 128, 256), dtype=jnp.float32)
    la = rmse_loss(xa, ya, block_rows=256)
    jax.block_until_ready(la)
    ra = jnp.sqrt(jnp.mean((xa - ya) ** 2))
    assert jnp.allclose(la, ra, rtol=1e-5, atol=1e-6), (la, ra)

    # Ragged rows + non-128-multiple tail path: 3*5*23*17 = 5865 elements
    # -> 45 full rows (masked ragged block) + 105-element JAX tail.
    k3, k4 = jax.random.split(k2)
    xb = jax.random.normal(k3, (3, 5, 23, 17), dtype=jnp.float32)
    yb = jax.random.normal(k4, (3, 5, 23, 17), dtype=jnp.float32)
    lb = rmse_loss(xb, yb, block_rows=32)
    jax.block_until_ready(lb)
    rb = jnp.sqrt(jnp.mean((xb - yb) ** 2))
    assert jnp.allclose(lb, rb, rtol=1e-5, atol=1e-6), (lb, rb)

    print("KERNEL_OK")
</pallas_src>

<mosaic_0001>
module attributes {stable_mosaic.version = 11 : i64} {
  func.func @_rmse_partial_kernel(%arg0: i32, %arg1: i32, %arg2: memref<16x128xf32, #tpu.memory_space<vmem>>, %arg3: memref<16x128xf32, #tpu.memory_space<vmem>>, %arg4: memref<1x8x128xf32, #tpu.memory_space<vmem>>) attributes {dimension_semantics = [#tpu.dimension_semantics<parallel>, #tpu.dimension_semantics<arbitrary>], iteration_bounds = array<i64: 1, 1>, scalar_prefetch = 0 : i64, scratch_operands = 0 : i64, tpu.core_type = #tpu.core_type<tc>, window_params = [{transform_indices = @transform_0, window_bounds = array<i64: 16, 128>}, {transform_indices = @transform_1, window_bounds = array<i64: 16, 128>}, {transform_indices = @transform_2, window_bounds = array<i64: 1, 8, 128>}]} {
    %c0_i32 = arith.constant 0 : i32
    %0 = arith.cmpi eq, %arg1, %c0_i32 : i32
    %1 = arith.extui %0 : i1 to i32
    %c0_i32_0 = arith.constant 0 : i32
    %2 = arith.cmpi ne, %1, %c0_i32_0 : i32
    scf.if %2 {
      %cst_10 = arith.constant 0.000000e+00 : f32
      %13 = vector.broadcast %cst_10 : f32 to vector<1x8x128xf32>
      %c0_11 = arith.constant 0 : index
      %c0_12 = arith.constant 0 : index
      %c0_13 = arith.constant 0 : index
      %14 = vector.load %arg4[%c0_11, %c0_12, %c0_13] : memref<1x8x128xf32, #tpu.memory_space<vmem>>, vector<1x8x128xf32>
      tpu.vector_store %arg4[%c0_11, %c0_12, %c0_13], %13 {strides = array<i32>} : memref<1x8x128xf32, #tpu.memory_space<vmem>>, vector<1x8x128xf32>,
    } else {
    }
    %c0 = arith.constant 0 : index
    %c0_1 = arith.constant 0 : index
    %3 = vector.load %arg2[%c0, %c0_1] : memref<16x128xf32, #tpu.memory_space<vmem>>, vector<16x128xf32>
    %c0_2 = arith.constant 0 : index
    %c0_3 = arith.constant 0 : index
    %4 = vector.load %arg3[%c0_2, %c0_3] : memref<16x128xf32, #tpu.memory_space<vmem>>, vector<16x128xf32>
    %5 = arith.subf %3, %4 : vector<16x128xf32>
    %6 = arith.mulf %5, %5 : vector<16x128xf32>
    %c0_4 = arith.constant 0 : index
    %c0_5 = arith.constant 0 : index
    %c0_6 = arith.constant 0 : index
    %7 = vector.load %arg4[%c0_4, %c0_5, %c0_6] : memref<1x8x128xf32, #tpu.memory_space<vmem>>, vector<1x8x128xf32>
    %8 = vector.shape_cast %6 : vector<16x128xf32> to vector<2x8x128xf32>
    %cst = arith.constant dense<0.000000e+00> : vector<8x128xf32>
    %9 = vector.multi_reduction <add>, %8, %cst [0] : vector<2x8x128xf32> to vector<8x128xf32>
    %10 = vector.shape_cast %9 : vector<8x128xf32> to vector<1x8x128xf32>
    %11 = arith.addf %7, %10 : vector<1x8x128xf32>
    %c0_7 = arith.constant 0 : index
    %c0_8 = arith.constant 0 : index
    %c0_9 = arith.constant 0 : index
    %12 = vector.load %arg4[%c0_7, %c0_8, %c0_9] : memref<1x8x128xf32, #tpu.memory_space<vmem>>, vector<1x8x128xf32>
    tpu.vector_store %arg4[%c0_7, %c0_8, %c0_9], %11 {strides = array<i32>} : memref<1x8x128xf32, #tpu.memory_space<vmem>>, vector<1x8x128xf32>,
    return
  }
  func.func @transform_0(%arg0: i32, %arg1: i32) -> (i32, i32) {
    %c1_i32 = arith.constant 1 : i32
    %0 = arith.muli %arg0, %c1_i32 : i32
    %1 = arith.addi %0, %arg1 : i32
    %c0_i32 = arith.constant 0 : i32
    %2 = arith.minsi %1, %c0_i32 : i32
    %c0_i32_0 = arith.constant 0 : i32
    %c0_i32_1 = arith.constant 0 : i32
    return %2, %c0_i32_0 : i32, i32
  }
  func.func @transform_1(%arg0: i32, %arg1: i32) -> (i32, i32) {
    %c1_i32 = arith.constant 1 : i32
    %0 = arith.muli %arg0, %c1_i32 : i32
    %1 = arith.addi %0, %arg1 : i32
    %c0_i32 = arith.constant 0 : i32
    %2 = arith.minsi %1, %c0_i32 : i32
    %c0_i32_0 = arith.constant 0 : i32
    %c0_i32_1 = arith.constant 0 : i32
    return %2, %c0_i32_0 : i32, i32
  }
  func.func @transform_2(%arg0: i32, %arg1: i32) -> (i32, i32, i32) {
    %c0_i32 = arith.constant 0 : i32
    %c0_i32_0 = arith.constant 0 : i32
    %c0_i32_1 = arith.constant 0 : i32
    return %arg0, %c0_i32, %c0_i32_0 : i32, i32, i32
  }
}

</mosaic_0001>

<llo_original>
// kernel: tpu_custom_call.1
$region0: #{tpu_custom_call.1}
  #allocation0 [shape = 'u32[]', space=smem, size = 0x4, offset = 0x4, fixed_abs, tag = 'smem constant byte address 0x4 - core index']
  #allocation1 [shape = 'u32[72,128]{1,0:T(1,128)}', space=vmem, size = 0x9000, scoped, tag = 'internal scratch']
  %s0 = inlined_call_operand.hbm [shape: f32[16,128], index: 0, kind: input, shape index: {}]
  %s1 = inlined_call_operand.hbm [shape: f32[16,128], index: 1, kind: input, shape index: {}]
  %s2 = inlined_call_operand.hbm [shape: f32[1,8,128], index: 2, kind: output, shape index: {}]
  %s3 = sld [smem:[#allocation0]]
  $region30: #{tpu_custom_call.1} parent=0
    _
  %s5 = ssub.s32 1, %s3
  %s6 = scalar_select 0, %s5, %s3
  $region1: #{tpu_custom_call.1} parent=0
    #allocation2 [shape = 'u8[8192]{0}', space=vmem, size = 0x2000, scoped, tag = 'input window, operand 0, single buffered']
    #allocation3 [shape = 's32[1]{0}', space=sflag, size = 0x4, scoped, tag = 'scoped memory for tpu_custom_call.1']
    #allocation4 [shape = 's32[1]{0}', space=sflag, size = 0x4, scoped, tag = 'scoped memory for tpu_custom_call.1']
    #allocation5 [shape = 'u8[8192]{0}', space=vmem, size = 0x2000, scoped, tag = 'input window, operand 1, single buffered']
    #allocation6 [shape = 's32[1]{0}', space=sflag, size = 0x4, scoped, tag = 'scoped memory for tpu_custom_call.1']
    #allocation7 [shape = 'u8[4096]{0}', space=vmem, size = 0x1000, scoped, tag = 'output window, operand 0, single buffered']
    %7 = vsyncpa [#allocation3], 0
    %8 = vsyncpa [#allocation6], 0
    %9 = vsyncpa [#allocation4], 0
    // Predicated region
    $region2: #{tpu_custom_call.1} parent=1 // pred_check
      _
    $region3: #{tpu_custom_call.1} parent=1 // pred_check_branch
      %11 = sbr.rel (0) target = $region5
    $region4: #{tpu_custom_call.1} parent=1 // pred_region
      %s12 = sadd.s32 0, 0
      %p13 = scmp.lt.s32.totalorder %s12, 0
      %s14 = scalar_select %p13, %s12, 0
      %s15 = smul.u32 2, %s14
      %17 = vsyncadd [#allocation3], 0
      %s18 = smul.addr %s15, 8
      %s19 = scalar_lea.hbm %s0, %s18
      %s20 = sshll.u32 %s19, 4
      %s21 = int_to_ptr.hbm [resolvable:$true] %s20
      %s22 = sshll.u32 [#allocation2], 4
      %s23 = int_to_ptr.vmem [resolvable:$true] %s22
      %28 = dma.hbm_to_vmem [thread:$0]  %s21, 256, %s23, [#allocation3], 128, 128, 8
    $region5: #{tpu_custom_call.1} parent=1 // pred_fallthru
      _
    // Predicated region
    $region6: #{tpu_custom_call.1} parent=1 // pred_check
      _
    $region7: #{tpu_custom_call.1} parent=1 // pred_check_branch
      %30 = sbr.rel (0) target = $region9
    $region8: #{tpu_custom_call.1} parent=1 // pred_region
      %s31 = sadd.s32 0, 0
      %p32 = scmp.lt.s32.totalorder %s31, 0
      %s33 = scalar_select %p32, %s31, 0
      %s34 = smul.u32 2, %s33
      %36 = vsyncadd [#allocation6], 0
      %s37 = smul.addr %s34, 8
      %s38 = scalar_lea.hbm %s1, %s37
      %s39 = sshll.u32 %s38, 4
      %s40 = int_to_ptr.hbm [resolvable:$true] %s39
      %s41 = sshll.u32 [#allocation5], 4
      %s42 = int_to_ptr.vmem [resolvable:$true] %s41
      %47 = dma.hbm_to_vmem [thread:$0]  %s40, 256, %s42, [#allocation6], 128, 128, 8
    $region9: #{tpu_custom_call.1} parent=1 // pred_fallthru
      _
    // Predicated region
    $region10: #{tpu_custom_call.1} parent=1 // pred_check
      _
    $region11: #{tpu_custom_call.1} parent=1 // pred_check_branch
      %49 = sbr.rel (0) target = $region13
    $region12: #{tpu_custom_call.1} parent=1 // pred_region
      %51 = dma.done [#allocation3], 256
    $region13: #{tpu_custom_call.1} parent=1 // pred_fallthru
      _
    // Predicated region
    $region14: #{tpu_custom_call.1} parent=1 // pred_check
      _
    $region15: #{tpu_custom_call.1} parent=1 // pred_check_branch
      %53 = sbr.rel (0) target = $region17
    $region16: #{tpu_custom_call.1} parent=1 // pred_region
      %55 = dma.done [#allocation6], 256
    $region17: #{tpu_custom_call.1} parent=1 // pred_fallthru
      _
    %s56 = sadd.s32 0, 0
    %p57 = scmp.lt.s32.totalorder %s56, 0
    %s58 = scalar_select %p57, %s56, 0
    %s59 = smul.u32 2, %s58
    %s60 = sadd.s32 0, 0
    %p61 = scmp.lt.s32.totalorder %s60, 0
    %s62 = scalar_select %p61, %s60, 0
    %s63 = smul.u32 2, %s62
    %p64 = scmp.eq.s32.totalorder 0, 0
    // Predicated region
    $region18: #{tpu_custom_call.1} parent=1 // pred_check
      %p65 = pneg %p64
    $region19: #{tpu_custom_call.1} parent=1 // pred_check_branch
      %67 = sbr.rel (%p65) target = $region21
    $region20: #{tpu_custom_call.1} parent=1 // pred_region
      %68 = vst [vmem:[#allocation7] sm:$0xff] 0.0
    $region21: #{tpu_custom_call.1} parent=1 // pred_fallthru
      _
    %v69 = vld [vmem:[#allocation2] sm:$0xff]
    %v70 = vld [vmem:[#allocation2 + $0x8] sm:$0xff]
    %v71 = vld [vmem:[#allocation5] sm:$0xff]
    %v72 = vld [vmem:[#allocation5 + $0x8] sm:$0xff]
    %v73 = vsub.f32 %v69, %v71
    %v74 = vsub.f32 %v70, %v72
    %v75 = vmul.f32 %v73, %v73
    %v76 = vmul.f32 %v74, %v74
    %v77 = vld [vmem:[#allocation7] sm:$0xff]
    %v78 = vadd.f32 %v75, %v76
    %v79 = vadd.f32 %v77, %v78
    %80 = vst [vmem:[#allocation7] sm:$0xff] %v79
    // Predicated region
    $region22: #{tpu_custom_call.1} parent=1 // pred_check
      _
    $region23: #{tpu_custom_call.1} parent=1 // pred_check_branch
      %82 = sbr.rel (0) target = $region25
    $region24: #{tpu_custom_call.1} parent=1 // pred_region
      %84 = vsyncadd [#allocation4], 0
      %s86 = sshll.u32 [#allocation7], 4
      %s87 = int_to_ptr.vmem [resolvable:$true] %s86
      %s88 = sshll.u32 %s2, 4
      %s89 = int_to_ptr.hbm [resolvable:$true] %s88
      %91 = dma.vmem_to_hbm [thread:$0]  %s87, 128, %s89, [#allocation4]
    $region25: #{tpu_custom_call.1} parent=1 // pred_fallthru
      _
    // Predicated region
    $region26: #{tpu_custom_call.1} parent=1 // pred_check
      _
    $region27: #{tpu_custom_call.1} parent=1 // pred_check_branch
      %93 = sbr.rel (0) target = $region29
    $region28: #{tpu_custom_call.1} parent=1 // pred_region
      %95 = dma.done [#allocation4], 128
    $region29: #{tpu_custom_call.1} parent=1 // pred_fallthru
      _
    %96 = vsyncpa [#allocation3], 1
    %97 = vsyncpa [#allocation6], 1
    %98 = vsyncpa [#allocation4], 1

</llo_original>
